<compile_context>
chip_gen: v5e
topology: v5e:2x2
jax: 0.10.0
libtpu: 0.0.40
codegen_flags: <defaults>
</compile_context>

<pallas_src>
import functools

import jax
import jax.numpy as jnp
from jax.experimental import pallas as pl
from jax.experimental.pallas import tpu as pltpu


def bigram_kernel(idx_ref, tgt_ref, emb_ref, w_ref, logits_ref, loss_ref):
    # idx_ref/tgt_ref: (1, 1, tm) int32   (lane-dense token ids for this tile)
    # emb_ref:         (Vp, E+1) bf16     ([embedding | 1] rows, zero-padded)
    # w_ref:           (Vp, E+1) bf16     ([head W | head b] rows, pad bias=-1e30)
    # logits_ref:      (tm, Vp)  f32
    # loss_ref:        (tm, 1)   f32      (per-row cross-entropy)
    Vp = emb_ref.shape[0]
    tm = logits_ref.shape[0]

    idx_row = idx_ref[0]                                    # (1, tm) int32
    tgt_row = tgt_ref[0]                                    # (1, tm) int32

    vocab_iota = jax.lax.broadcasted_iota(jnp.int32, (Vp, tm), 0)

    # One-hot gathers, transposed orientation: vocab on sublanes, tokens on
    # lanes.  Keeps token ids lane-dense and avoids any explicit transpose.
    oh_idx = (vocab_iota == idx_row).astype(emb_ref.dtype)  # (Vp, tm)
    oh_tgt = (vocab_iota == tgt_row).astype(w_ref.dtype)    # (Vp, tm)

    # Embedding lookup: rows of [E | 1] gathered on the MXU -> (tm, E+1).
    # Exact (one-hot), so the bf16 round-trip below is lossless.
    embs = jax.lax.dot_general(
        oh_idx, emb_ref[...],
        (((0,), (0,)), ((), ())),
        preferred_element_type=jnp.float32)                 # (tm, E+1) f32

    # Head: logits = [E | 1] @ [W | b]^T, contracting on E+1 (bias folded in,
    # no transposed weight copy anywhere).  f32 accumulation on the MXU.
    logits = jax.lax.dot_general(
        embs.astype(w_ref.dtype), w_ref[...],
        (((1,), (1,)), ((), ())),
        preferred_element_type=jnp.float32)                 # (tm, Vp) f32
    logits_ref[...] = logits                                # lane-dense store

    # Numerically stable log-sum-exp.  Padded vocab columns carry a -1e30
    # bias, so they never affect the max and exp() to exactly 0.
    m = jnp.max(logits, axis=-1, keepdims=True)             # (tm, 1)
    lse = m + jnp.log(jnp.sum(jnp.exp(logits - m), axis=-1, keepdims=True))

    # Target logit without a lane gather:
    #   logits[r, tgt[r]] = <[E|1][idx[r]], [W|b][tgt[r]]>
    w_tgt = jax.lax.dot_general(
        oh_tgt, w_ref[...],
        (((0,), (0,)), ((), ())),
        preferred_element_type=jnp.float32)                 # (tm, E+1) f32
    tgt_logit = jnp.sum(embs * w_tgt, axis=-1, keepdims=True)  # (tm, 1)

    loss_ref[...] = lse - tgt_logit                         # per-row CE


def bigram_forward(idx, targets, emb_table, head_w, head_b, *, tm=128):
    """idx, targets: (B, T) int32 (targets may be None).

    Returns (logits, loss) with PyTorch semantics:
      targets given -> logits (B*T, V) f32, loss = mean cross-entropy (scalar)
      targets None  -> logits (B, T, V) f32, loss = None
    """
    B, T = idx.shape
    V, E = emb_table.shape
    BT = B * T
    Vp = pl.cdiv(V, 128) * 128          # lane-dense logits / full MXU N tile
    BTp = pl.cdiv(BT, tm) * tm
    grid = BTp // tm
    NEG = jnp.float32(-1e30)

    # Fold the bias into an extra contraction column:  emb_aug = [E | 1],
    # w_aug = [W | b]; padded vocab rows get weight 0 and "bias" -1e30.
    emb_aug = jnp.concatenate([emb_table, jnp.ones((V, 1), jnp.float32)], axis=1)
    emb_aug = jnp.concatenate(
        [emb_aug, jnp.zeros((Vp - V, E + 1), jnp.float32)], axis=0)        # (Vp, E+1)
    w_aug = jnp.concatenate([head_w, head_b[:, None]], axis=1)             # (V,  E+1)
    w_pad_rows = jnp.concatenate(
        [jnp.zeros((Vp - V, E), jnp.float32),
         jnp.full((Vp - V, 1), NEG, jnp.float32)], axis=1)                 # (Vp-V, E+1)
    w_aug = jnp.concatenate([w_aug, w_pad_rows], axis=0)                   # (Vp, E+1)

    emb_aug = emb_aug.astype(jnp.bfloat16)   # bf16 operands, f32 accumulation
    w_aug = w_aug.astype(jnp.bfloat16)

    # Token ids / targets: flatten, pad to BTp, shape (grid, 1, tm) so every
    # kernel block is a lane-dense (1, tm) int32 row.
    def prep_ids(x):
        x = x.reshape(BT).astype(jnp.int32)
        x = jnp.concatenate([x, jnp.zeros((BTp - BT,), jnp.int32)])
        return x.reshape(grid, 1, tm)

    idx3 = prep_ids(idx)
    tgt3 = prep_ids(targets if targets is not None else jnp.zeros_like(idx))

    logits_pad, loss_rows = pl.pallas_call(
        bigram_kernel,
        out_shape=(
            jax.ShapeDtypeStruct((BTp, Vp), jnp.float32),
            jax.ShapeDtypeStruct((BTp, 1), jnp.float32),
        ),
        grid_spec=pltpu.PrefetchScalarGridSpec(
            num_scalar_prefetch=0,
            grid=(grid,),
            in_specs=[
                pl.BlockSpec((1, 1, tm), lambda i: (i, 0, 0)),    # idx tile
                pl.BlockSpec((1, 1, tm), lambda i: (i, 0, 0)),    # target tile
                pl.BlockSpec((Vp, E + 1), lambda i: (0, 0)),      # [emb | 1]
                pl.BlockSpec((Vp, E + 1), lambda i: (0, 0)),      # [W | b]
            ],
            out_specs=[
                pl.BlockSpec((tm, Vp), lambda i: (i, 0)),         # logits
                pl.BlockSpec((tm, 1), lambda i: (i, 0)),          # per-row loss
            ],
        ),
        compiler_params=pltpu.CompilerParams(
            # Row tiles are fully independent -> megacore-parallel on v7x.
            dimension_semantics=("parallel",)),
    )(idx3, tgt3, emb_aug, w_aug)

    logits = logits_pad[:BT, :V]                      # drop row/vocab padding
    if targets is None:
        return logits.reshape(B, T, V), None
    # Mean over the real B*T rows only (padded rows excluded), outside kernel.
    loss = jnp.sum(loss_rows[:BT, 0]) / BT
    return logits, loss


def bigram_reference(idx, targets, emb_table, head_w, head_b):
    """Pure-JAX f32 reference matching the PyTorch module."""
    B, T = idx.shape
    V = emb_table.shape[0]
    embs = emb_table[idx]                                  # (B, T, E)
    logits = embs @ head_w.T + head_b                      # (B, T, V)
    logits = logits.reshape(B * T, V)
    tgt = targets.reshape(B * T)
    lse = jax.scipy.special.logsumexp(logits, axis=-1)
    tl = jnp.take_along_axis(logits, tgt[:, None], axis=-1)[:, 0]
    loss = jnp.mean(lse - tl)
    return logits, loss


if __name__ == "__main__":
    # Shakespeare-style toy problem: vocab_size=65, N_EMB=32.
    # B*T = 240 exercises both row-tiling (grid=2) and BT padding (240 -> 256).
    VOCAB = 65
    N_EMB = 32
    B, T = 8, 30

    key = jax.random.PRNGKey(0)
    k_emb, k_w, k_b, k_idx, k_tgt = jax.random.split(key, 5)

    emb_table = jax.random.normal(k_emb, (VOCAB, N_EMB), jnp.float32) * 0.02
    head_w = jax.random.normal(k_w, (VOCAB, N_EMB), jnp.float32) * 0.02
    head_b = jax.random.normal(k_b, (VOCAB,), jnp.float32) * 0.02

    idx = jax.random.randint(k_idx, (B, T), 0, VOCAB, jnp.int32)
    targets = jax.random.randint(k_tgt, (B, T), 0, VOCAB, jnp.int32)

    logits, loss = bigram_forward(idx, targets, emb_table, head_w, head_b)
    jax.block_until_ready((logits, loss))

    ref_logits, ref_loss = bigram_reference(idx, targets, emb_table, head_w, head_b)
    assert logits.shape == (B * T, VOCAB)
    # bf16 weights + f32 accumulation vs pure-f32 reference -> loose-ish tol.
    assert jnp.allclose(logits, ref_logits, atol=2e-3, rtol=2e-3)
    assert jnp.allclose(loss, ref_loss, atol=2e-3, rtol=2e-3)

    # targets=None path (PyTorch: logits (B, T, C), loss None).
    logits3, loss_none = bigram_forward(idx, None, emb_table, head_w, head_b)
    jax.block_until_ready(logits3)
    assert loss_none is None and logits3.shape == (B, T, VOCAB)
    assert jnp.allclose(logits3.reshape(B * T, VOCAB), ref_logits, atol=2e-3, rtol=2e-3)

    print("KERNEL_OK")
</pallas_src>

<mosaic_0001>
module attributes {stable_mosaic.version = 11 : i64} {
  func.func @bigram_kernel(%arg0: i32, %arg1: memref<1x1x128xi32, #tpu.memory_space<vmem>>, %arg2: memref<1x1x128xi32, #tpu.memory_space<vmem>>, %arg3: memref<128x33xbf16, #tpu.memory_space<vmem>>, %arg4: memref<128x33xbf16, #tpu.memory_space<vmem>>, %arg5: memref<128x128xf32, #tpu.memory_space<vmem>>, %arg6: memref<128x1xf32, #tpu.memory_space<vmem>>) attributes {dimension_semantics = [#tpu.dimension_semantics<parallel>], iteration_bounds = array<i64: 2>, scalar_prefetch = 0 : i64, scratch_operands = 0 : i64, tpu.core_type = #tpu.core_type<tc>, window_params = [{transform_indices = @transform_0, window_bounds = array<i64: 1, 1, 128>}, {transform_indices = @transform_1, window_bounds = array<i64: 1, 1, 128>}, {pipeline_mode = #tpu.pipeline_mode<synchronous>, transform_indices = @transform_2, window_bounds = array<i64: 128, 33>}, {pipeline_mode = #tpu.pipeline_mode<synchronous>, transform_indices = @transform_3, window_bounds = array<i64: 128, 33>}, {transform_indices = @transform_4, window_bounds = array<i64: 128, 128>}, {transform_indices = @transform_5, window_bounds = array<i64: 128, 1>}]} {
    %c0 = arith.constant 0 : index
    %c0_0 = arith.constant 0 : index
    %c0_1 = arith.constant 0 : index
    %0 = vector.load %arg1[%c0, %c0_0, %c0_1] : memref<1x1x128xi32, #tpu.memory_space<vmem>>, vector<1x1x128xi32>
    %1 = vector.shape_cast %0 : vector<1x1x128xi32> to vector<1x128xi32>
    %c0_2 = arith.constant 0 : index
    %c0_3 = arith.constant 0 : index
    %c0_4 = arith.constant 0 : index
    %2 = vector.load %arg2[%c0_2, %c0_3, %c0_4] : memref<1x1x128xi32, #tpu.memory_space<vmem>>, vector<1x1x128xi32>
    %3 = vector.shape_cast %2 : vector<1x1x128xi32> to vector<1x128xi32>
    %4 = tpu.iota {dimensions = array<i32: 0>} : vector<128x128xi32>
    %5 = vector.broadcast %1 : vector<1x128xi32> to vector<128x128xi32>
    %6 = arith.cmpi eq, %4, %5 : vector<128x128xi32>
    %7 = arith.extui %6 : vector<128x128xi1> to vector<128x128xi32>
    %8 = arith.sitofp %7 : vector<128x128xi32> to vector<128x128xf32>
    %9 = arith.truncf %8 : vector<128x128xf32> to vector<128x128xbf16>
    %10 = vector.broadcast %3 : vector<1x128xi32> to vector<128x128xi32>
    %11 = arith.cmpi eq, %4, %10 : vector<128x128xi32>
    %12 = arith.extui %11 : vector<128x128xi1> to vector<128x128xi32>
    %13 = arith.sitofp %12 : vector<128x128xi32> to vector<128x128xf32>
    %14 = arith.truncf %13 : vector<128x128xf32> to vector<128x128xbf16>
    %c0_5 = arith.constant 0 : index
    %c0_6 = arith.constant 0 : index
    %15 = vector.load %arg3[%c0_5, %c0_6] : memref<128x33xbf16, #tpu.memory_space<vmem>>, vector<128x33xbf16>
    %cst = arith.constant dense<0.000000e+00> : vector<128x33xf32>
    %16 = tpu.matmul %9, %15, %cst {dimension_numbers = #tpu.dot_dimension_numbers<[0], [0], [1], [1], [0, 1, 1, 1], [], []>} : vector<128x128xbf16>, vector<128x33xbf16>, vector<128x33xf32> -> vector<128x33xf32>
    %17 = arith.truncf %16 : vector<128x33xf32> to vector<128x33xbf16>
    %c0_7 = arith.constant 0 : index
    %c0_8 = arith.constant 0 : index
    %18 = vector.load %arg4[%c0_7, %c0_8] : memref<128x33xbf16, #tpu.memory_space<vmem>>, vector<128x33xbf16>
    %cst_9 = arith.constant dense<0.000000e+00> : vector<128x128xf32>
    %19 = tpu.matmul %17, %18, %cst_9 {dimension_numbers = #tpu.dot_dimension_numbers<[1], [1], [0], [0], [0, 0, 1, 0], [], []>} : vector<128x33xbf16>, vector<128x33xbf16>, vector<128x128xf32> -> vector<128x128xf32>
    %c0_10 = arith.constant 0 : index
    %c0_11 = arith.constant 0 : index
    %20 = vector.load %arg5[%c0_10, %c0_11] : memref<128x128xf32, #tpu.memory_space<vmem>>, vector<128x128xf32>
    tpu.vector_store %arg5[%c0_10, %c0_11], %19 {strides = array<i32>} : memref<128x128xf32, #tpu.memory_space<vmem>>, vector<128x128xf32>,
    %cst_12 = arith.constant dense<0xFF800000> : vector<128xf32>
    %21 = vector.multi_reduction <maximumf>, %19, %cst_12 [1] : vector<128x128xf32> to vector<128xf32>
    %22 = vector.shape_cast %21 : vector<128xf32> to vector<128x1xf32>
    %23 = vector.broadcast %22 : vector<128x1xf32> to vector<128x128xf32>
    %24 = arith.subf %19, %23 : vector<128x128xf32>
    %25 = math.exp %24 : vector<128x128xf32>
    %cst_13 = arith.constant dense<0.000000e+00> : vector<128xf32>
    %26 = vector.multi_reduction <add>, %25, %cst_13 [1] : vector<128x128xf32> to vector<128xf32>
    %27 = vector.shape_cast %26 : vector<128xf32> to vector<128x1xf32>
    %28 = math.log %27 : vector<128x1xf32>
    %29 = arith.addf %22, %28 : vector<128x1xf32>
    %c0_14 = arith.constant 0 : index
    %c0_15 = arith.constant 0 : index
    %30 = vector.load %arg4[%c0_14, %c0_15] : memref<128x33xbf16, #tpu.memory_space<vmem>>, vector<128x33xbf16>
    %cst_16 = arith.constant dense<0.000000e+00> : vector<128x33xf32>
    %31 = tpu.matmul %14, %30, %cst_16 {dimension_numbers = #tpu.dot_dimension_numbers<[0], [0], [1], [1], [0, 1, 1, 1], [], []>} : vector<128x128xbf16>, vector<128x33xbf16>, vector<128x33xf32> -> vector<128x33xf32>
    %32 = arith.mulf %16, %31 : vector<128x33xf32>
    %cst_17 = arith.constant dense<0.000000e+00> : vector<128xf32>
    %33 = vector.multi_reduction <add>, %32, %cst_17 [1] : vector<128x33xf32> to vector<128xf32>
    %34 = vector.shape_cast %33 : vector<128xf32> to vector<128x1xf32>
    %35 = arith.subf %29, %34 : vector<128x1xf32>
    %c0_18 = arith.constant 0 : index
    %c0_19 = arith.constant 0 : index
    %36 = vector.load %arg6[%c0_18, %c0_19] : memref<128x1xf32, #tpu.memory_space<vmem>>, vector<128x1xf32>
    tpu.vector_store %arg6[%c0_18, %c0_19], %35 {strides = array<i32>} : memref<128x1xf32, #tpu.memory_space<vmem>>, vector<128x1xf32>,
    return
  }
  func.func @transform_0(%arg0: i32) -> (i32, i32, i32) {
    %c0_i32 = arith.constant 0 : i32
    %c0_i32_0 = arith.constant 0 : i32
    %c0_i32_1 = arith.constant 0 : i32
    return %arg0, %c0_i32, %c0_i32_0 : i32, i32, i32
  }
  func.func @transform_1(%arg0: i32) -> (i32, i32, i32) {
    %c0_i32 = arith.constant 0 : i32
    %c0_i32_0 = arith.constant 0 : i32
    %c0_i32_1 = arith.constant 0 : i32
    return %arg0, %c0_i32, %c0_i32_0 : i32, i32, i32
  }
  func.func @transform_2(%arg0: i32) -> (i32, i32) {
    %c0_i32 = arith.constant 0 : i32
    %c0_i32_0 = arith.constant 0 : i32
    %c0_i32_1 = arith.constant 0 : i32
    return %c0_i32, %c0_i32_0 : i32, i32
  }
  func.func @transform_3(%arg0: i32) -> (i32, i32) {
    %c0_i32 = arith.constant 0 : i32
    %c0_i32_0 = arith.constant 0 : i32
    %c0_i32_1 = arith.constant 0 : i32
    return %c0_i32, %c0_i32_0 : i32, i32
  }
  func.func @transform_4(%arg0: i32) -> (i32, i32) {
    %c0_i32 = arith.constant 0 : i32
    %c0_i32_0 = arith.constant 0 : i32
    return %arg0, %c0_i32 : i32, i32
  }
  func.func @transform_5(%arg0: i32) -> (i32, i32) {
    %c0_i32 = arith.constant 0 : i32
    %c0_i32_0 = arith.constant 0 : i32
    return %arg0, %c0_i32 : i32, i32
  }
}

</mosaic_0001>

<llo_original>
// kernel: tpu_custom_call.1
$region0: #{tpu_custom_call.1}
  #allocation0 [shape = 'u32[]', space=smem, size = 0x4, offset = 0x4, fixed_abs, tag = 'smem constant byte address 0x4 - core index']
  #allocation1 [shape = 'u32[72,128]{1,0:T(1,128)}', space=vmem, size = 0x9000, scoped, tag = 'internal scratch']
  %s0 = inlined_call_operand.vmem [shape: s32[2,1,128], index: 0, kind: input, shape index: {}]
  %s1 = inlined_call_operand.vmem [shape: s32[2,1,128], index: 1, kind: input, shape index: {}]
  %s2 = inlined_call_operand.vmem [shape: bf16[128,33], index: 2, kind: input, shape index: {}]
  %s3 = inlined_call_operand.vmem [shape: bf16[128,33], index: 3, kind: input, shape index: {}]
  %s4 = inlined_call_operand.hbm [shape: f32[256,128], index: 4, kind: output, shape index: {0}]
  %s5 = inlined_call_operand.vmem [shape: f32[256,1], index: 5, kind: output, shape index: {1}]
  %6 = xla_tuple %s4, %s5
  %s7 = sld [smem:[#allocation0]]
  $region57: #{tpu_custom_call.1} parent=0
    _
  %s9 = ssub.s32 1, %s7
  %s10 = scalar_select 0, %s9, %s7
  $region1: #{tpu_custom_call.1} parent=0
    #allocation2 [shape = 'u8[131072]{0}', space=vmem, size = 0x20000, scoped, tag = 'output window, operand 0']
    #allocation3 [shape = 's32[2]{0}', space=sflag, size = 0x8, scoped, tag = 'scoped memory for tpu_custom_call.1']
    %11 = vsyncpa [#allocation3], 0
    %s12 = scalar_lea.sflag [#allocation3], 1
    %13 = vsyncpa %s12, 0
    loop: start=0, step=1, limit=4
    $region2: #{tpu_custom_call.1} parent=1 // loop_pre_header
      _
    $region3: #{tpu_custom_call.1} parent=1 // loop_header
      %s15 = sphi 0, %s19
      %p16 = scmp.ge.s32.totalorder %s15, 4
      %s25 = sphi 0, %s27
      %s28 = sphi 0, %s25
      %s29 = sphi 0, %s28
      %s45 = sphi 0, %s29
      %s51 = sphi 0, %s53
      %s54 = sphi 0, %s51
      %s55 = sphi 0, %s54
      %s71 = sphi 0, %s55
      %s75 = sphi 0, %s75
      %s77 = sphi 0, %s75
      %s78 = sphi 0, %s77
      %s92 = sphi 0, %s78
      %s96 = sphi 0, %s96
      %s98 = sphi 0, %s96
      %s99 = sphi 0, %s98
      %s113 = sphi 0, %s99
      %s119 = sphi 0, %s121
      %s122 = sphi 0, %s119
      %s123 = sphi 0, %s122
      %s139 = sphi 0, %s123
      %s145 = sphi 0, %s147
      %s148 = sphi 0, %s145
      %s149 = sphi 0, %s148
      %s165 = sphi 0, %s149
    $region4: #{tpu_custom_call.1} parent=1 // loop_header_branch
      %18 = sbr.rel (%p16) target = $region8
    $region5: #{tpu_custom_call.1} parent=1 // loop_body
      %s20 = ssub.s32 %s15, 1
      %s21 = ssub.s32 %s15, 2
      %s22 = sadd.s32 %s15, 1
      %s23 = ssub.s32 %s15, %s22
      %p24 = scmp.eq.s32.totalorder %s23, 0
      %s26 = sadd.s32 %s25, 1
      %s27 = scalar_select %p24, %s25, %s26
      %p30 = pneg %p24
      %p31 = scmp.eq.s32.totalorder %s15, 1
      %p32 = por %p30, %p31
      %p33 = scmp.ne.s32.totalorder %s25, %s28
      %p34 = scmp.eq.s32.totalorder %s15, 0
      %p35 = por %p33, %p34
      %p36 = scmp.ne.s32.totalorder %s25, %s28
      %p37 = scmp.eq.s32.totalorder %s20, 1
      %p38 = por %p36, %p37
      %p39 = scmp.ne.s32.totalorder %s28, %s29
      %p40 = scmp.eq.s32.totalorder %s20, 0
      %p41 = por %p39, %p40
      %p42 = scmp.ne.s32.totalorder %s28, %s29
      %p43 = scmp.eq.s32.totalorder %s21, 1
      %p44 = por %p42, %p43
      %p46 = scmp.ne.s32.totalorder %s29, %s45
      %p47 = scmp.eq.s32.totalorder %s21, 0
      %p48 = por %p46, %p47
      %s49 = ssub.s32 %s15, %s22
      %p50 = scmp.eq.s32.totalorder %s49, 0
      %s52 = sadd.s32 %s51, 1
      %s53 = scalar_select %p50, %s51, %s52
      %p56 = pneg %p50
      %p57 = scmp.eq.s32.totalorder %s15, 1
      %p58 = por %p56, %p57
      %p59 = scmp.ne.s32.totalorder %s51, %s54
      %p60 = scmp.eq.s32.totalorder %s15, 0
      %p61 = por %p59, %p60
      %p62 = scmp.ne.s32.totalorder %s51, %s54
      %p63 = scmp.eq.s32.totalorder %s20, 1
      %p64 = por %p62, %p63
      %p65 = scmp.ne.s32.totalorder %s54, %s55
      %p66 = scmp.eq.s32.totalorder %s20, 0
      %p67 = por %p65, %p66
      %p68 = scmp.ne.s32.totalorder %s54, %s55
      %p69 = scmp.eq.s32.totalorder %s21, 1
      %p70 = por %p68, %p69
      %p72 = scmp.ne.s32.totalorder %s55, %s71
      %p73 = scmp.eq.s32.totalorder %s21, 0
      %p74 = por %p72, %p73
      %s76 = sadd.s32 %s75, 1
      %p79 = scmp.eq.s32.totalorder %s15, 1
      %p80 = scmp.ne.s32.totalorder %s75, %s77
      %p81 = scmp.eq.s32.totalorder %s15, 0
      %p82 = por %p80, %p81
      %p83 = scmp.ne.s32.totalorder %s75, %s77
      %p84 = scmp.eq.s32.totalorder %s20, 1
      %p85 = por %p83, %p84
      %p86 = scmp.ne.s32.totalorder %s77, %s78
      %p87 = scmp.eq.s32.totalorder %s20, 0
      %p88 = por %p86, %p87
      %p89 = scmp.ne.s32.totalorder %s77, %s78
      %p90 = scmp.eq.s32.totalorder %s21, 1
      %p91 = por %p89, %p90
      %p93 = scmp.ne.s32.totalorder %s78, %s92
      %p94 = scmp.eq.s32.totalorder %s21, 0
      %p95 = por %p93, %p94
      %s97 = sadd.s32 %s96, 1
      %p100 = scmp.eq.s32.totalorder %s15, 1
      %p101 = scmp.ne.s32.totalorder %s96, %s98
      %p102 = scmp.eq.s32.totalorder %s15, 0
      %p103 = por %p101, %p102
      %p104 = scmp.ne.s32.totalorder %s96, %s98
      %p105 = scmp.eq.s32.totalorder %s20, 1
      %p106 = por %p104, %p105
      %p107 = scmp.ne.s32.totalorder %s98, %s99
      %p108 = scmp.eq.s32.totalorder %s20, 0
      %p109 = por %p107, %p108
      %p110 = scmp.ne.s32.totalorder %s98, %s99
      %p111 = scmp.eq.s32.totalorder %s21, 1
      %p112 = por %p110, %p111
      %p114 = scmp.ne.s32.totalorder %s99, %s113
      %p115 = scmp.eq.s32.totalorder %s21, 0
      %p116 = por %p114, %p115
      %s117 = ssub.s32 %s15, %s22
      %p118 = scmp.eq.s32.totalorder %s117, 0
      %s120 = sadd.s32 %s119, 1
      %s121 = scalar_select %p118, %s119, %s120
      %p124 = pneg %p118
      %p125 = scmp.eq.s32.totalorder %s15, 1
      %p126 = por %p124, %p125
      %p127 = scmp.ne.s32.totalorder %s119, %s122
      %p128 = scmp.eq.s32.totalorder %s15, 0
      %p129 = por %p127, %p128
      %p130 = scmp.ne.s32.totalorder %s119, %s122
      %p131 = scmp.eq.s32.totalorder %s20, 1
      %p132 = por %p130, %p131
      %p133 = scmp.ne.s32.totalorder %s122, %s123
      %p134 = scmp.eq.s32.totalorder %s20, 0
      %p135 = por %p133, %p134
      %p136 = scmp.ne.s32.totalorder %s122, %s123
      %p137 = scmp.eq.s32.totalorder %s21, 1
      %p138 = por %p136, %p137
      %p140 = scmp.ne.s32.totalorder %s123, %s139
      %p141 = scmp.eq.s32.totalorder %s21, 0
      %p142 = por %p140, %p141
      %s143 = ssub.s32 %s15, %s22
      %p144 = scmp.eq.s32.totalorder %s143, 0
      %s146 = sadd.s32 %s145, 1
      %s147 = scalar_select %p144, %s145, %s146
      %p150 = pneg %p144
      %p151 = scmp.eq.s32.totalorder %s15, 1
      %p152 = por %p150, %p151
      %p153 = scmp.ne.s32.totalorder %s145, %s148
      %p154 = scmp.eq.s32.totalorder %s15, 0
      %p155 = por %p153, %p154
      %p156 = scmp.ne.s32.totalorder %s145, %s148
      %p157 = scmp.eq.s32.totalorder %s20, 1
      %p158 = por %p156, %p157
      %p159 = scmp.ne.s32.totalorder %s148, %s149
      %p160 = scmp.eq.s32.totalorder %s20, 0
      %p161 = por %p159, %p160
      %p162 = scmp.ne.s32.totalorder %s148, %s149
      %p163 = scmp.eq.s32.totalorder %s21, 1
      %p164 = por %p162, %p163
      %p166 = scmp.ne.s32.totalorder %s149, %s165
      %p167 = scmp.eq.s32.totalorder %s21, 0
      %p168 = por %p166, %p167
      %p169 = scmp.le.s32.totalorder 1, %s15
      %p170 = scmp.lt.s32.totalorder %s15, 3
      %p171 = pnand %p169, %p170
      %p172 = pneg %p171
      // Predicated region
      $region9: #{tpu_custom_call.1} parent=5 // pred_check
        _
      $region10: #{tpu_custom_call.1} parent=5 // pred_check_branch
        %174 = sbr.rel (%p171) target = $region12
      $region11: #{tpu_custom_call.1} parent=5 // pred_region
        %s175 = ssub.s32 %s15, 1
        // Predicated region
        $region13: #{tpu_custom_call.1} parent=11 // pred_check
          %p176 = pneg %p88
        $region14: #{tpu_custom_call.1} parent=11 // pred_check_branch
          %178 = sbr.rel (%p176) target = $region16
        $region15: #{tpu_custom_call.1} parent=11 // pred_region
          _
        $region16: #{tpu_custom_call.1} parent=11 // pred_fallthru
          _
        // Predicated region
        $region17: #{tpu_custom_call.1} parent=11 // pred_check
          %p179 = pneg %p109
        $region18: #{tpu_custom_call.1} parent=11 // pred_check_branch
          %181 = sbr.rel (%p179) target = $region20
        $region19: #{tpu_custom_call.1} parent=11 // pred_region
          _
        $region20: #{tpu_custom_call.1} parent=11 // pred_fallthru
          _
      $region12: #{tpu_custom_call.1} parent=5 // pred_fallthru
        _
      %p182 = scmp.lt.s32.totalorder %s15, 2
      // Predicated region
      $region21: #{tpu_custom_call.1} parent=5 // pred_check
        %p183 = pneg %p182
      $region22: #{tpu_custom_call.1} parent=5 // pred_check_branch
        %185 = sbr.rel (%p183) target = $region24
      $region23: #{tpu_custom_call.1} parent=5 // pred_region
        // Predicated region
        $region25: #{tpu_custom_call.1} parent=23 // pred_check
          %p186 = pneg %p35
        $region26: #{tpu_custom_call.1} parent=23 // pred_check_branch
          %188 = sbr.rel (%p186) target = $region28
        $region27: #{tpu_custom_call.1} parent=23 // pred_region
          %p189 = scmp.lt.s32.totalorder %s15, 1
          %s190 = scalar_select %p189, %s15, 1
          %s191 = scalar_lea.vmem %s0, %s190
        $region28: #{tpu_custom_call.1} parent=23 // pred_fallthru
          _
        // Predicated region
        $region29: #{tpu_custom_call.1} parent=23 // pred_check
          %p192 = pneg %p61
        $region30: #{tpu_custom_call.1} parent=23 // pred_check_branch
          %194 = sbr.rel (%p192) target = $region32
        $region31: #{tpu_custom_call.1} parent=23 // pred_region
          %p195 = scmp.lt.s32.totalorder %s15, 1
          %s196 = scalar_select %p195, %s15, 1
          %s197 = scalar_lea.vmem %s1, %s196
        $region32: #{tpu_custom_call.1} parent=23 // pred_fallthru
          _
      $region24: #{tpu_custom_call.1} parent=5 // pred_fallthru
        _
      %p198 = scmp.le.s32.totalorder 1, %s15
      %p199 = scmp.lt.s32.totalorder %s15, 3
      %p200 = pnand %p198, %p199
      %p201 = pneg %p200
      // Predicated region
      $region33: #{tpu_custom_call.1} parent=5 // pred_check
        _
      $region34: #{tpu_custom_call.1} parent=5 // pred_check_branch
        %203 = sbr.rel (%p200) target = $region36
      $region35: #{tpu_custom_call.1} parent=5 // pred_region
        %s204 = ssub.s32 %s15, 1
        %p205 = scmp.lt.s32.totalorder %s20, 1
        %s206 = scalar_select %p205, %s20, 1
        %s207 = scalar_lea.vmem %s0, %s206
        %p208 = pneg %p41
        %p209 = pneg %p38
        %p210 = scmp.lt.s32.totalorder %s20, 1
        %s211 = scalar_select %p210, %s20, 1
        %s212 = scalar_lea.vmem %s1, %s211
        %p213 = pneg %p67
        %p214 = pneg %p64
        %p215 = pneg %p88
        %p216 = pneg %p85
        %p217 = pneg %p109
        %p218 = pneg %p106
        %p219 = pneg %p135
        %p220 = pneg %p132
        %s221 = sand.u32 %s122, 1
        %s222 = scalar_lea.sflag [#allocation3], %s221
        %s223 = sand.u32 %s122, 1
        %s224 = smul.addr %s223, 128
        %s225 = scalar_lea.vmem [#allocation2], %s224
        %p226 = pneg %p161
        %p227 = pneg %p158
        %s228 = smul.u32 16, %s20
        %p229 = scmp.lt.s32.totalorder %s228, 31
        %s230 = scalar_select %p229, %s228, 31
        %s231 = smul.addr %s230, 8
        %s232 = scalar_lea.vmem %s5, %s231
        %p233 = scmp.lt.s32.totalorder %s20, 1
        %s234 = scalar_select %p233, %s20, 1
        %s235 = scalar_lea.vmem %s0, %s234
        %p236 = scmp.lt.s32.totalorder %s20, 1
        %s237 = scalar_select %p236, %s20, 1
        %s238 = scalar_lea.vmem %s1, %s237
        %s239 = smul.u32 16, %s20
        %s240 = smul.u32 16, %s20
        %p241 = scmp.lt.s32.totalorder %s240, 31
        %s242 = scalar_select %p241, %s240, 31
        %s243 = smul.addr %s242, 8
        %s244 = scalar_lea.vmem %s5, %s243
        %s245 = smul.u32 16, %s20
        %v246 = vld [vmem:[%s235] sm:$0x1]
        %v247 = vld [vmem:[%s238] sm:$0x1]
        %v248 = vlaneseq
        %v249 = vshrl.u32 %v248, 7
        %v250 = vadd.s32 %v249, 8
        %v251 = vadd.s32 %v249, 16
        %v252 = vadd.s32 %v249, 24
        %v253 = vadd.s32 %v249, 32
        %v254 = vadd.s32 %v249, 40
        %v255 = vadd.s32 %v249, 48
        %v256 = vadd.s32 %v249, 56
        %v257 = vadd.s32 %v249, 64
        %v258 = vadd.s32 %v249, 72
        %v259 = vadd.s32 %v249, 80
        %v260 = vadd.s32 %v249, 88
        %v261 = vadd.s32 %v249, 96
        %v262 = vadd.s32 %v249, 104
        %v263 = vadd.s32 %v249, 112
        %v264 = vadd.s32 %v249, 120
        %v265 = vperm.slane %v246, 0
        %vm266 = vcmp.eq.s32.totalorder %v249, %v265
        %vm267 = vcmp.eq.s32.totalorder %v250, %v265
        %vm268 = vcmp.eq.s32.totalorder %v251, %v265
        %vm269 = vcmp.eq.s32.totalorder %v252, %v265
        %vm270 = vcmp.eq.s32.totalorder %v253, %v265
        %vm271 = vcmp.eq.s32.totalorder %v254, %v265
        %vm272 = vcmp.eq.s32.totalorder %v255, %v265
        %vm273 = vcmp.eq.s32.totalorder %v256, %v265
        %vm274 = vcmp.eq.s32.totalorder %v257, %v265
        %vm275 = vcmp.eq.s32.totalorder %v258, %v265
        %vm276 = vcmp.eq.s32.totalorder %v259, %v265
        %vm277 = vcmp.eq.s32.totalorder %v260, %v265
        %vm278 = vcmp.eq.s32.totalorder %v261, %v265
        %vm279 = vcmp.eq.s32.totalorder %v262, %v265
        %vm280 = vcmp.eq.s32.totalorder %v263, %v265
        %vm281 = vcmp.eq.s32.totalorder %v264, %v265
        %v282 = vsel %vm266, 1, 0
        %v283 = vsel %vm267, 1, 0
        %v284 = vsel %vm268, 1, 0
        %v285 = vsel %vm269, 1, 0
        %v286 = vsel %vm270, 1, 0
        %v287 = vsel %vm271, 1, 0
        %v288 = vsel %vm272, 1, 0
        %v289 = vsel %vm273, 1, 0
        %v290 = vsel %vm274, 1, 0
        %v291 = vsel %vm275, 1, 0
        %v292 = vsel %vm276, 1, 0
        %v293 = vsel %vm277, 1, 0
        %v294 = vsel %vm278, 1, 0
        %v295 = vsel %vm279, 1, 0
        %v296 = vsel %vm280, 1, 0
        %v297 = vsel %vm281, 1, 0
        %v298 = vcvt.s32.f32 %v282
        %v299 = vcvt.s32.f32 %v283
        %v300 = vcvt.s32.f32 %v284
        %v301 = vcvt.s32.f32 %v285
        %v302 = vcvt.s32.f32 %v286
        %v303 = vcvt.s32.f32 %v287
        %v304 = vcvt.s32.f32 %v288
        %v305 = vcvt.s32.f32 %v289
        %v306 = vcvt.s32.f32 %v290
        %v307 = vcvt.s32.f32 %v291
        %v308 = vcvt.s32.f32 %v292
        %v309 = vcvt.s32.f32 %v293
        %v310 = vcvt.s32.f32 %v294
        %v311 = vcvt.s32.f32 %v295
        %v312 = vcvt.s32.f32 %v296
        %v313 = vcvt.s32.f32 %v297
        %v314 = vpack.c.bf16 %v299, %v298
        %v315 = vpack.c.bf16 %v301, %v300
        %v316 = vpack.c.bf16 %v303, %v302
        %v317 = vpack.c.bf16 %v305, %v304
        %v318 = vpack.c.bf16 %v307, %v306
        %v319 = vpack.c.bf16 %v309, %v308
        %v320 = vpack.c.bf16 %v311, %v310
        %v321 = vpack.c.bf16 %v313, %v312
        %v322 = vperm.slane %v247, 0
        %vm323 = vcmp.eq.s32.totalorder %v249, %v322
        %vm324 = vcmp.eq.s32.totalorder %v250, %v322
        %vm325 = vcmp.eq.s32.totalorder %v251, %v322
        %vm326 = vcmp.eq.s32.totalorder %v252, %v322
        %vm327 = vcmp.eq.s32.totalorder %v253, %v322
        %vm328 = vcmp.eq.s32.totalorder %v254, %v322
        %vm329 = vcmp.eq.s32.totalorder %v255, %v322
        %vm330 = vcmp.eq.s32.totalorder %v256, %v322
        %vm331 = vcmp.eq.s32.totalorder %v257, %v322
        %vm332 = vcmp.eq.s32.totalorder %v258, %v322
        %vm333 = vcmp.eq.s32.totalorder %v259, %v322
        %vm334 = vcmp.eq.s32.totalorder %v260, %v322
        %vm335 = vcmp.eq.s32.totalorder %v261, %v322
        %vm336 = vcmp.eq.s32.totalorder %v262, %v322
        %vm337 = vcmp.eq.s32.totalorder %v263, %v322
        %vm338 = vcmp.eq.s32.totalorder %v264, %v322
        %v339 = vsel %vm323, 1, 0
        %v340 = vsel %vm324, 1, 0
        %v341 = vsel %vm325, 1, 0
        %v342 = vsel %vm326, 1, 0
        %v343 = vsel %vm327, 1, 0
        %v344 = vsel %vm328, 1, 0
        %v345 = vsel %vm329, 1, 0
        %v346 = vsel %vm330, 1, 0
        %v347 = vsel %vm331, 1, 0
        %v348 = vsel %vm332, 1, 0
        %v349 = vsel %vm333, 1, 0
        %v350 = vsel %vm334, 1, 0
        %v351 = vsel %vm335, 1, 0
        %v352 = vsel %vm336, 1, 0
        %v353 = vsel %vm337, 1, 0
        %v354 = vsel %vm338, 1, 0
        %v355 = vcvt.s32.f32 %v339
        %v356 = vcvt.s32.f32 %v340
        %v357 = vcvt.s32.f32 %v341
        %v358 = vcvt.s32.f32 %v342
        %v359 = vcvt.s32.f32 %v343
        %v360 = vcvt.s32.f32 %v344
        %v361 = vcvt.s32.f32 %v345
        %v362 = vcvt.s32.f32 %v346
        %v363 = vcvt.s32.f32 %v347
        %v364 = vcvt.s32.f32 %v348
        %v365 = vcvt.s32.f32 %v349
        %v366 = vcvt.s32.f32 %v350
        %v367 = vcvt.s32.f32 %v351
        %v368 = vcvt.s32.f32 %v352
        %v369 = vcvt.s32.f32 %v353
        %v370 = vcvt.s32.f32 %v354
        %v371 = vpack.c.bf16 %v356, %v355
        %v372 = vpack.c.bf16 %v358, %v357
        %v373 = vpack.c.bf16 %v360, %v359
        %v374 = vpack.c.bf16 %v362, %v361
        %v375 = vpack.c.bf16 %v364, %v363
        %v376 = vpack.c.bf16 %v366, %v365
        %v377 = vpack.c.bf16 %v368, %v367
        %v378 = vpack.c.bf16 %v370, %v369
        %v379 = vld [vmem:[%s2] sm:$0xf]
        %v380 = vld [vmem:[%s2 + $0x4] sm:$0xf]
        %v381 = vld [vmem:[%s2 + $0x8] sm:$0xf]
        %v382 = vld [vmem:[%s2 + $0xc] sm:$0xf]
        %v383 = vld [vmem:[%s2 + $0x10] sm:$0xf]
        %v384 = vld [vmem:[%s2 + $0x14] sm:$0xf]
        %v385 = vld [vmem:[%s2 + $0x18] sm:$0xf]
        %v386 = vld [vmem:[%s2 + $0x1c] sm:$0xf]
        %v387 = vld [vmem:[%s2 + $0x20] sm:$0xf]
        %v388 = vld [vmem:[%s2 + $0x24] sm:$0xf]
        %v389 = vld [vmem:[%s2 + $0x28] sm:$0xf]
        %v390 = vld [vmem:[%s2 + $0x2c] sm:$0xf]
        %v391 = vld [vmem:[%s2 + $0x30] sm:$0xf]
        %v392 = vld [vmem:[%s2 + $0x34] sm:$0xf]
        %v393 = vld [vmem:[%s2 + $0x38] sm:$0xf]
        %v394 = vld [vmem:[%s2 + $0x3c] sm:$0xf]
        %395 = vxpose.xlu0.c.b16.start [1/8] %v314, 128
        %396 = vxpose.xlu0.c.b16.cont [2/8] %v315, 128
        %397 = vxpose.xlu0.c.b16.cont [3/8] %v316, 128
        %398 = vxpose.xlu0.c.b16.cont [4/8] %v317, 128
        %399 = vxpose.xlu0.c.b16.cont [5/8] %v318, 128
        %400 = vxpose.xlu0.c.b16.cont [6/8] %v319, 128
        %401 = vxpose.xlu0.c.b16.cont [7/8] %v320, 128
        %402 = vxpose.xlu0.c.b16.end [8/8] %v321, 128
        %v403 = vpop.trf.xlu0
        %v404 = vpop.trf.xlu0
        %v405 = vpop.trf.xlu0
        %v406 = vpop.trf.xlu0
        %v407 = vpop.trf.xlu0
        %v408 = vpop.trf.xlu0
        %v409 = vpop.trf.xlu0
        %v410 = vpop.trf.xlu0
        %v427 = vunpack.c.l.b16 %v379
        %v428 = vunpack.c.l.b16 %v380
        %v429 = vunpack.c.l.b16 %v381
        %v430 = vunpack.c.l.b16 %v382
        %v431 = vunpack.c.l.b16 %v383
        %v432 = vunpack.c.l.b16 %v384
        %v433 = vunpack.c.l.b16 %v385
        %v434 = vunpack.c.l.b16 %v386
        %v435 = vunpack.c.l.b16 %v387
        %v436 = vunpack.c.l.b16 %v388
        %v437 = vunpack.c.l.b16 %v389
        %v438 = vunpack.c.l.b16 %v390
        %v439 = vunpack.c.l.b16 %v391
        %v440 = vunpack.c.l.b16 %v392
        %v441 = vunpack.c.l.b16 %v393
        %v442 = vunpack.c.l.b16 %v394
        %v443 = vpack.c.b16 %v428, %v427
        %v444 = vpack.c.b16 %v430, %v429
        %v445 = vpack.c.b16 %v432, %v431
        %v446 = vpack.c.b16 %v434, %v433
        %v447 = vpack.c.b16 %v436, %v435
        %v448 = vpack.c.b16 %v438, %v437
        %v449 = vpack.c.b16 %v440, %v439
        %v450 = vpack.c.b16 %v442, %v441
        %459 = vmatpush.bf16.msra.mxu0 %v450
        %460 = vmatpush.bf16.msra.mxu0 %v449
        %461 = vmatpush.bf16.msra.mxu0 %v448
        %462 = vmatpush.bf16.msra.mxu0 %v447
        %463 = vmatpush.bf16.msra.mxu0 %v446
        %464 = vmatpush.bf16.msra.mxu0 %v445
        %465 = vmatpush.bf16.msra.mxu0 %v444
        %466 = vmatpush.bf16.msra.mxu0 %v443
        %467 = vmatmul.bf16.gmra.mxu0 %v403
        %v468 = vpop.f32.mrf.mxu0
        %v469 = vadd.f32 0.0, %v468
        %v470 = vpop.f32.mrf.mxu0
        %v471 = vadd.f32 0.0, %v470
        %472 = vmatmul.bf16.gmra.mxu0 %v404
        %v473 = vpop.f32.mrf.mxu0
        %v474 = vadd.f32 0.0, %v473
        %v475 = vpop.f32.mrf.mxu0
        %v476 = vadd.f32 0.0, %v475
        %477 = vmatmul.bf16.gmra.mxu0 %v405
        %v478 = vpop.f32.mrf.mxu0
        %v479 = vadd.f32 0.0, %v478
        %v480 = vpop.f32.mrf.mxu0
        %v481 = vadd.f32 0.0, %v480
        %482 = vmatmul.bf16.gmra.mxu0 %v406
        %v483 = vpop.f32.mrf.mxu0
        %v484 = vadd.f32 0.0, %v483
        %v485 = vpop.f32.mrf.mxu0
        %v486 = vadd.f32 0.0, %v485
        %487 = vmatmul.bf16.gmra.mxu0 %v407
        %v488 = vpop.f32.mrf.mxu0
        %v489 = vadd.f32 0.0, %v488
        %v490 = vpop.f32.mrf.mxu0
        %v491 = vadd.f32 0.0, %v490
        %492 = vmatmul.bf16.gmra.mxu0 %v408
        %v493 = vpop.f32.mrf.mxu0
        %v494 = vadd.f32 0.0, %v493
        %v495 = vpop.f32.mrf.mxu0
        %v496 = vadd.f32 0.0, %v495
        %497 = vmatmul.bf16.gmra.mxu0 %v409
        %v498 = vpop.f32.mrf.mxu0
        %v499 = vadd.f32 0.0, %v498
        %v500 = vpop.f32.mrf.mxu0
        %v501 = vadd.f32 0.0, %v500
        %502 = vmatmul.bf16.gmra.mxu0 %v410
        %v503 = vpop.f32.mrf.mxu0
        %v504 = vadd.f32 0.0, %v503
        %v505 = vpop.f32.mrf.mxu0
        %v506 = vadd.f32 0.0, %v505
        %507 = vdwg.mxu0
        %v508 = vpack.c.bf16 %v471, %v469
        %v509 = vpack.c.bf16 %v476, %v474
        %v510 = vpack.c.bf16 %v481, %v479
        %v511 = vpack.c.bf16 %v486, %v484
        %v512 = vpack.c.bf16 %v491, %v489
        %v513 = vpack.c.bf16 %v496, %v494
        %v514 = vpack.c.bf16 %v501, %v499
        %v515 = vpack.c.bf16 %v506, %v504
        %v516 = vld [vmem:[%s3] sm:$0xf]
        %v517 = vld [vmem:[%s3 + $0x4] sm:$0xf]
        %v518 = vld [vmem:[%s3 + $0x8] sm:$0xf]
        %v519 = vld [vmem:[%s3 + $0xc] sm:$0xf]
        %v520 = vld [vmem:[%s3 + $0x10] sm:$0xf]
        %v521 = vld [vmem:[%s3 + $0x14] sm:$0xf]
        %v522 = vld [vmem:[%s3 + $0x18] sm:$0xf]
        %v523 = vld [vmem:[%s3 + $0x1c] sm:$0xf]
        %v524 = vld [vmem:[%s3 + $0x20] sm:$0xf]
        %v525 = vld [vmem:[%s3 + $0x24] sm:$0xf]
        %v526 = vld [vmem:[%s3 + $0x28] sm:$0xf]
        %v527 = vld [vmem:[%s3 + $0x2c] sm:$0xf]
        %v528 = vld [vmem:[%s3 + $0x30] sm:$0xf]
        %v529 = vld [vmem:[%s3 + $0x34] sm:$0xf]
        %v530 = vld [vmem:[%s3 + $0x38] sm:$0xf]
        %v531 = vld [vmem:[%s3 + $0x3c] sm:$0xf]
        %v548 = vunpack.c.l.b16 %v516
        %v549 = vunpack.c.l.b16 %v517
        %v550 = vunpack.c.l.b16 %v518
        %v551 = vunpack.c.l.b16 %v519
        %v552 = vunpack.c.l.b16 %v520
        %v553 = vunpack.c.l.b16 %v521
        %v554 = vunpack.c.l.b16 %v522
        %v555 = vunpack.c.l.b16 %v523
        %v556 = vunpack.c.l.b16 %v524
        %v557 = vunpack.c.l.b16 %v525
        %v558 = vunpack.c.l.b16 %v526
        %v559 = vunpack.c.l.b16 %v527
        %v560 = vunpack.c.l.b16 %v528
        %v561 = vunpack.c.l.b16 %v529
        %v562 = vunpack.c.l.b16 %v530
        %v563 = vunpack.c.l.b16 %v531
        %v564 = vpack.c.b16 %v549, %v548
        %v565 = vpack.c.b16 %v551, %v550
        %v566 = vpack.c.b16 %v553, %v552
        %v567 = vpack.c.b16 %v555, %v554
        %v568 = vpack.c.b16 %v557, %v556
        %v569 = vpack.c.b16 %v559, %v558
        %v570 = vpack.c.b16 %v561, %v560
        %v571 = vpack.c.b16 %v563, %v562
        %vm572 = vcmask 269312
        %v574 = vsel %vm572, %v508, 0
        %v577 = vsel %vm572, %v509, 0
        %v580 = vsel %vm572, %v510, 0
        %v583 = vsel %vm572, %v511, 0
        %v586 = vsel %vm572, %v512, 0
        %v589 = vsel %vm572, %v513, 0
        %v592 = vsel %vm572, %v514, 0
        %v595 = vsel %vm572, %v515, 0
        %v598 = vsel %vm572, %v564, 0
        %v601 = vsel %vm572, %v565, 0
        %v604 = vsel %vm572, %v566, 0
        %v607 = vsel %vm572, %v567, 0
        %v610 = vsel %vm572, %v568, 0
        %v613 = vsel %vm572, %v569, 0
        %v616 = vsel %vm572, %v570, 0
        %v619 = vsel %vm572, %v571, 0
        %621 = vmatpush.bf16.xpose.msra.mxu0 %v619
        %622 = vmatpush.bf16.xpose.msra.mxu0 %v616
        %623 = vmatpush.bf16.xpose.msra.mxu0 %v613
        %624 = vmatpush.bf16.xpose.msra.mxu0 %v610
        %625 = vmatpush.bf16.xpose.msra.mxu0 %v607
        %626 = vmatpush.bf16.xpose.msra.mxu0 %v604
        %627 = vmatpush.bf16.xpose.msra.mxu0 %v601
        %628 = vmatpush.bf16.xpose.msra.mxu0 %v598
        %629 = vmatmul.bf16.gmra.mxu0 %v574
        %v630 = vpop.f32.mrf.mxu0
        %v631 = vadd.f32 0.0, %v630
        %v632 = vpop.f32.mrf.mxu0
        %v633 = vadd.f32 0.0, %v632
        %634 = vmatmul.bf16.gmra.mxu0 %v577
        %v635 = vpop.f32.mrf.mxu0
        %v636 = vadd.f32 0.0, %v635
        %v637 = vpop.f32.mrf.mxu0
        %v638 = vadd.f32 0.0, %v637
        %639 = vmatmul.bf16.gmra.mxu0 %v580
        %v640 = vpop.f32.mrf.mxu0
        %v641 = vadd.f32 0.0, %v640
        %v642 = vpop.f32.mrf.mxu0
        %v643 = vadd.f32 0.0, %v642
        %644 = vmatmul.bf16.gmra.mxu0 %v583
        %v645 = vpop.f32.mrf.mxu0
        %v646 = vadd.f32 0.0, %v645
        %v647 = vpop.f32.mrf.mxu0
        %v648 = vadd.f32 0.0, %v647
        %649 = vmatmul.bf16.gmra.mxu0 %v586
        %v650 = vpop.f32.mrf.mxu0
        %v651 = vadd.f32 0.0, %v650
        %v652 = vpop.f32.mrf.mxu0
        %v653 = vadd.f32 0.0, %v652
        %654 = vmatmul.bf16.gmra.mxu0 %v589
        %v655 = vpop.f32.mrf.mxu0
        %v656 = vadd.f32 0.0, %v655
        %v657 = vpop.f32.mrf.mxu0
        %v658 = vadd.f32 0.0, %v657
        %659 = vmatmul.bf16.gmra.mxu0 %v592
        %v660 = vpop.f32.mrf.mxu0
        %v661 = vadd.f32 0.0, %v660
        %v662 = vpop.f32.mrf.mxu0
        %v663 = vadd.f32 0.0, %v662
        %664 = vmatmul.bf16.gmra.mxu0 %v595
        %v665 = vpop.f32.mrf.mxu0
        %v666 = vadd.f32 0.0, %v665
        %v667 = vpop.f32.mrf.mxu0
        %v668 = vadd.f32 0.0, %v667
        %669 = vdwg.mxu0
        %670 = vst [vmem:[%s225] sm:$0xff] %v631
        %671 = vst [vmem:[%s225 + $0x8] sm:$0xff] %v633
        %672 = vst [vmem:[%s225 + $0x10] sm:$0xff] %v636
        %673 = vst [vmem:[%s225 + $0x18] sm:$0xff] %v638
        %674 = vst [vmem:[%s225 + $0x20] sm:$0xff] %v641
        %675 = vst [vmem:[%s225 + $0x28] sm:$0xff] %v643
        %676 = vst [vmem:[%s225 + $0x30] sm:$0xff] %v646
        %677 = vst [vmem:[%s225 + $0x38] sm:$0xff] %v648
        %678 = vst [vmem:[%s225 + $0x40] sm:$0xff] %v651
        %679 = vst [vmem:[%s225 + $0x48] sm:$0xff] %v653
        %680 = vst [vmem:[%s225 + $0x50] sm:$0xff] %v656
        %681 = vst [vmem:[%s225 + $0x58] sm:$0xff] %v658
        %682 = vst [vmem:[%s225 + $0x60] sm:$0xff] %v661
        %683 = vst [vmem:[%s225 + $0x68] sm:$0xff] %v663
        %684 = vst [vmem:[%s225 + $0x70] sm:$0xff] %v666
        %685 = vst [vmem:[%s225 + $0x78] sm:$0xff] %v668
        %686 = vmax.xlane.f32.xlu0 %v631
        %v687 = vpop.xlane.xlu0 %686
        %688 = vmax.xlane.f32.xlu0 %v633
        %v689 = vpop.xlane.xlu0 %688
        %690 = vmax.xlane.f32.xlu0 %v636
        %v691 = vpop.xlane.xlu0 %690
        %692 = vmax.xlane.f32.xlu0 %v638
        %v693 = vpop.xlane.xlu0 %692
        %694 = vmax.xlane.f32.xlu0 %v641
        %v695 = vpop.xlane.xlu0 %694
        %696 = vmax.xlane.f32.xlu0 %v643
        %v697 = vpop.xlane.xlu0 %696
        %698 = vmax.xlane.f32.xlu0 %v646
        %v699 = vpop.xlane.xlu0 %698
        %700 = vmax.xlane.f32.xlu0 %v648
        %v701 = vpop.xlane.xlu0 %700
        %702 = vmax.xlane.f32.xlu0 %v651
        %v703 = vpop.xlane.xlu0 %702
        %704 = vmax.xlane.f32.xlu0 %v653
        %v705 = vpop.xlane.xlu0 %704
        %706 = vmax.xlane.f32.xlu0 %v656
        %v707 = vpop.xlane.xlu0 %706
        %708 = vmax.xlane.f32.xlu0 %v658
        %v709 = vpop.xlane.xlu0 %708
        %710 = vmax.xlane.f32.xlu0 %v661
        %v711 = vpop.xlane.xlu0 %710
        %712 = vmax.xlane.f32.xlu0 %v663
        %v713 = vpop.xlane.xlu0 %712
        %714 = vmax.xlane.f32.xlu0 %v666
        %v715 = vpop.xlane.xlu0 %714
        %716 = vmax.xlane.f32.xlu0 %v668
        %v717 = vpop.xlane.xlu0 %716
        %v718 = vsub.f32 %v631, %v687
        %v719 = vsub.f32 %v633, %v689
        %v720 = vsub.f32 %v636, %v691
        %v721 = vsub.f32 %v638, %v693
        %v722 = vsub.f32 %v641, %v695
        %v723 = vsub.f32 %v643, %v697
        %v724 = vsub.f32 %v646, %v699
        %v725 = vsub.f32 %v648, %v701
        %v726 = vsub.f32 %v651, %v703
        %v727 = vsub.f32 %v653, %v705
        %v728 = vsub.f32 %v656, %v707
        %v729 = vsub.f32 %v658, %v709
        %v730 = vsub.f32 %v661, %v711
        %v731 = vsub.f32 %v663, %v713
        %v732 = vsub.f32 %v666, %v715
        %v733 = vsub.f32 %v668, %v717
        %v734 = vmul.f32 %v718, 1.442695
        %v735 = vpow.pop %v734
        %v736 = vmul.f32 %v719, 1.442695
        %v737 = vpow.pop %v736
        %v738 = vmul.f32 %v720, 1.442695
        %v739 = vpow.pop %v738
        %v740 = vmul.f32 %v721, 1.442695
        %v741 = vpow.pop %v740
        %v742 = vmul.f32 %v722, 1.442695
        %v743 = vpow.pop %v742
        %v744 = vmul.f32 %v723, 1.442695
        %v745 = vpow.pop %v744
        %v746 = vmul.f32 %v724, 1.442695
        %v747 = vpow.pop %v746
        %v748 = vmul.f32 %v725, 1.442695
        %v749 = vpow.pop %v748
        %v750 = vmul.f32 %v726, 1.442695
        %v751 = vpow.pop %v750
        %v752 = vmul.f32 %v727, 1.442695
        %v753 = vpow.pop %v752
        %v754 = vmul.f32 %v728, 1.442695
        %v755 = vpow.pop %v754
        %v756 = vmul.f32 %v729, 1.442695
        %v757 = vpow.pop %v756
        %v758 = vmul.f32 %v730, 1.442695
        %v759 = vpow.pop %v758
        %v760 = vmul.f32 %v731, 1.442695
        %v761 = vpow.pop %v760
        %v762 = vmul.f32 %v732, 1.442695
        %v763 = vpow.pop %v762
        %v764 = vmul.f32 %v733, 1.442695
        %v765 = vpow.pop %v764
        %766 = vadd.xlane.f32.xlu0 %v735
        %v767 = vpop.xlane.xlu0 %766
        %768 = vadd.xlane.f32.xlu0 %v737
        %v769 = vpop.xlane.xlu0 %768
        %770 = vadd.xlane.f32.xlu0 %v739
        %v771 = vpop.xlane.xlu0 %770
        %772 = vadd.xlane.f32.xlu0 %v741
        %v773 = vpop.xlane.xlu0 %772
        %774 = vadd.xlane.f32.xlu0 %v743
        %v775 = vpop.xlane.xlu0 %774
        %776 = vadd.xlane.f32.xlu0 %v745
        %v777 = vpop.xlane.xlu0 %776
        %778 = vadd.xlane.f32.xlu0 %v747
        %v779 = vpop.xlane.xlu0 %778
        %780 = vadd.xlane.f32.xlu0 %v749
        %v781 = vpop.xlane.xlu0 %780
        %782 = vadd.xlane.f32.xlu0 %v751
        %v783 = vpop.xlane.xlu0 %782
        %784 = vadd.xlane.f32.xlu0 %v753
        %v785 = vpop.xlane.xlu0 %784
        %786 = vadd.xlane.f32.xlu0 %v755
        %v787 = vpop.xlane.xlu0 %786
        %788 = vadd.xlane.f32.xlu0 %v757
        %v789 = vpop.xlane.xlu0 %788
        %790 = vadd.xlane.f32.xlu0 %v759
        %v791 = vpop.xlane.xlu0 %790
        %792 = vadd.xlane.f32.xlu0 %v761
        %v793 = vpop.xlane.xlu0 %792
        %794 = vadd.xlane.f32.xlu0 %v763
        %v795 = vpop.xlane.xlu0 %794
        %796 = vadd.xlane.f32.xlu0 %v765
        %v797 = vpop.xlane.xlu0 %796
        %v798 = vlog2.pop %v767
        %v799 = vmul.f32 %v798, 0.6931472
        %v800 = vlog2.pop %v769
        %v801 = vmul.f32 %v800, 0.6931472
        %v802 = vlog2.pop %v771
        %v803 = vmul.f32 %v802, 0.6931472
        %v804 = vlog2.pop %v773
        %v805 = vmul.f32 %v804, 0.6931472
        %v806 = vlog2.pop %v775
        %v807 = vmul.f32 %v806, 0.6931472
        %v808 = vlog2.pop %v777
        %v809 = vmul.f32 %v808, 0.6931472
        %v810 = vlog2.pop %v779
        %v811 = vmul.f32 %v810, 0.6931472
        %v812 = vlog2.pop %v781
        %v813 = vmul.f32 %v812, 0.6931472
        %v814 = vlog2.pop %v783
        %v815 = vmul.f32 %v814, 0.6931472
        %v816 = vlog2.pop %v785
        %v817 = vmul.f32 %v816, 0.6931472
        %v818 = vlog2.pop %v787
        %v819 = vmul.f32 %v818, 0.6931472
        %v820 = vlog2.pop %v789
        %v821 = vmul.f32 %v820, 0.6931472
        %v822 = vlog2.pop %v791
        %v823 = vmul.f32 %v822, 0.6931472
        %v824 = vlog2.pop %v793
        %v825 = vmul.f32 %v824, 0.6931472
        %v826 = vlog2.pop %v795
        %v827 = vmul.f32 %v826, 0.6931472
        %v828 = vlog2.pop %v797
        %v829 = vmul.f32 %v828, 0.6931472
        %v830 = vadd.f32 %v687, %v799
        %v831 = vadd.f32 %v689, %v801
        %v832 = vadd.f32 %v691, %v803
        %v833 = vadd.f32 %v693, %v805
        %v834 = vadd.f32 %v695, %v807
        %v835 = vadd.f32 %v697, %v809
        %v836 = vadd.f32 %v699, %v811
        %v837 = vadd.f32 %v701, %v813
        %v838 = vadd.f32 %v703, %v815
        %v839 = vadd.f32 %v705, %v817
        %v840 = vadd.f32 %v707, %v819
        %v841 = vadd.f32 %v709, %v821
        %v842 = vadd.f32 %v711, %v823
        %v843 = vadd.f32 %v713, %v825
        %v844 = vadd.f32 %v715, %v827
        %v845 = vadd.f32 %v717, %v829
        %v846 = vld [vmem:[%s3] sm:$0xf]
        %v847 = vld [vmem:[%s3 + $0x4] sm:$0xf]
        %v848 = vld [vmem:[%s3 + $0x8] sm:$0xf]
        %v849 = vld [vmem:[%s3 + $0xc] sm:$0xf]
        %v850 = vld [vmem:[%s3 + $0x10] sm:$0xf]
        %v851 = vld [vmem:[%s3 + $0x14] sm:$0xf]
        %v852 = vld [vmem:[%s3 + $0x18] sm:$0xf]
        %v853 = vld [vmem:[%s3 + $0x1c] sm:$0xf]
        %v854 = vld [vmem:[%s3 + $0x20] sm:$0xf]
        %v855 = vld [vmem:[%s3 + $0x24] sm:$0xf]
        %v856 = vld [vmem:[%s3 + $0x28] sm:$0xf]
        %v857 = vld [vmem:[%s3 + $0x2c] sm:$0xf]
        %v858 = vld [vmem:[%s3 + $0x30] sm:$0xf]
        %v859 = vld [vmem:[%s3 + $0x34] sm:$0xf]
        %v860 = vld [vmem:[%s3 + $0x38] sm:$0xf]
        %v861 = vld [vmem:[%s3 + $0x3c] sm:$0xf]
        %862 = vxpose.xlu0.c.b16.start [1/8] %v371, 128
        %863 = vxpose.xlu0.c.b16.cont [2/8] %v372, 128
        %864 = vxpose.xlu0.c.b16.cont [3/8] %v373, 128
        %865 = vxpose.xlu0.c.b16.cont [4/8] %v374, 128
        %866 = vxpose.xlu0.c.b16.cont [5/8] %v375, 128
        %867 = vxpose.xlu0.c.b16.cont [6/8] %v376, 128
        %868 = vxpose.xlu0.c.b16.cont [7/8] %v377, 128
        %869 = vxpose.xlu0.c.b16.end [8/8] %v378, 128
        %v870 = vpop.trf.xlu0
        %v871 = vpop.trf.xlu0
        %v872 = vpop.trf.xlu0
        %v873 = vpop.trf.xlu0
        %v874 = vpop.trf.xlu0
        %v875 = vpop.trf.xlu0
        %v876 = vpop.trf.xlu0
        %v877 = vpop.trf.xlu0
        %v894 = vunpack.c.l.b16 %v846
        %v895 = vunpack.c.l.b16 %v847
        %v896 = vunpack.c.l.b16 %v848
        %v897 = vunpack.c.l.b16 %v849
        %v898 = vunpack.c.l.b16 %v850
        %v899 = vunpack.c.l.b16 %v851
        %v900 = vunpack.c.l.b16 %v852
        %v901 = vunpack.c.l.b16 %v853
        %v902 = vunpack.c.l.b16 %v854
        %v903 = vunpack.c.l.b16 %v855
        %v904 = vunpack.c.l.b16 %v856
        %v905 = vunpack.c.l.b16 %v857
        %v906 = vunpack.c.l.b16 %v858
        %v907 = vunpack.c.l.b16 %v859
        %v908 = vunpack.c.l.b16 %v860
        %v909 = vunpack.c.l.b16 %v861
        %v910 = vpack.c.b16 %v895, %v894
        %v911 = vpack.c.b16 %v897, %v896
        %v912 = vpack.c.b16 %v899, %v898
        %v913 = vpack.c.b16 %v901, %v900
        %v914 = vpack.c.b16 %v903, %v902
        %v915 = vpack.c.b16 %v905, %v904
        %v916 = vpack.c.b16 %v907, %v906
        %v917 = vpack.c.b16 %v909, %v908
        %926 = vmatpush.bf16.msra.mxu0 %v917
        %927 = vmatpush.bf16.msra.mxu0 %v916
        %928 = vmatpush.bf16.msra.mxu0 %v915
        %929 = vmatpush.bf16.msra.mxu0 %v914
        %930 = vmatpush.bf16.msra.mxu0 %v913
        %931 = vmatpush.bf16.msra.mxu0 %v912
        %932 = vmatpush.bf16.msra.mxu0 %v911
        %933 = vmatpush.bf16.msra.mxu0 %v910
        %934 = vmatmul.bf16.gmra.mxu0 %v870
        %v935 = vpop.f32.mrf.mxu0
        %v936 = vadd.f32 0.0, %v935
        %v937 = vpop.f32.mrf.mxu0
        %v938 = vadd.f32 0.0, %v937
        %939 = vmatmul.bf16.gmra.mxu0 %v871
        %v940 = vpop.f32.mrf.mxu0
        %v941 = vadd.f32 0.0, %v940
        %v942 = vpop.f32.mrf.mxu0
        %v943 = vadd.f32 0.0, %v942
        %944 = vmatmul.bf16.gmra.mxu0 %v872
        %v945 = vpop.f32.mrf.mxu0
        %v946 = vadd.f32 0.0, %v945
        %v947 = vpop.f32.mrf.mxu0
        %v948 = vadd.f32 0.0, %v947
        %949 = vmatmul.bf16.gmra.mxu0 %v873
        %v950 = vpop.f32.mrf.mxu0
        %v951 = vadd.f32 0.0, %v950
        %v952 = vpop.f32.mrf.mxu0
        %v953 = vadd.f32 0.0, %v952
        %954 = vmatmul.bf16.gmra.mxu0 %v874
        %v955 = vpop.f32.mrf.mxu0
        %v956 = vadd.f32 0.0, %v955
        %v957 = vpop.f32.mrf.mxu0
        %v958 = vadd.f32 0.0, %v957
        %959 = vmatmul.bf16.gmra.mxu0 %v875
        %v960 = vpop.f32.mrf.mxu0
        %v961 = vadd.f32 0.0, %v960
        %v962 = vpop.f32.mrf.mxu0
        %v963 = vadd.f32 0.0, %v962
        %964 = vmatmul.bf16.gmra.mxu0 %v876
        %v965 = vpop.f32.mrf.mxu0
        %v966 = vadd.f32 0.0, %v965
        %v967 = vpop.f32.mrf.mxu0
        %v968 = vadd.f32 0.0, %v967
        %969 = vmatmul.bf16.gmra.mxu0 %v877
        %v970 = vpop.f32.mrf.mxu0
        %v971 = vadd.f32 0.0, %v970
        %v972 = vpop.f32.mrf.mxu0
        %v973 = vadd.f32 0.0, %v972
        %974 = vdwg.mxu0
        %v975 = vmul.f32 %v469, %v936
        %v976 = vmul.f32 %v471, %v938
        %v977 = vmul.f32 %v474, %v941
        %v978 = vmul.f32 %v476, %v943
        %v979 = vmul.f32 %v479, %v946
        %v980 = vmul.f32 %v481, %v948
        %v981 = vmul.f32 %v484, %v951
        %v982 = vmul.f32 %v486, %v953
        %v983 = vmul.f32 %v489, %v956
        %v984 = vmul.f32 %v491, %v958
        %v985 = vmul.f32 %v494, %v961
        %v986 = vmul.f32 %v496, %v963
        %v987 = vmul.f32 %v499, %v966
        %v988 = vmul.f32 %v501, %v968
        %v989 = vmul.f32 %v504, %v971
        %v990 = vmul.f32 %v506, %v973
        %v991 = vsel %vm572, %v975, 0.0
        %992 = vadd.xlane.f32.xlu0 %v991
        %v993 = vpop.xlane.xlu0 %992
        %v994 = vsel %vm572, %v976, 0.0
        %995 = vadd.xlane.f32.xlu0 %v994
        %v996 = vpop.xlane.xlu0 %995
        %v997 = vsel %vm572, %v977, 0.0
        %998 = vadd.xlane.f32.xlu0 %v997
        %v999 = vpop.xlane.xlu0 %998
        %v1000 = vsel %vm572, %v978, 0.0
        %1001 = vadd.xlane.f32.xlu0 %v1000
        %v1002 = vpop.xlane.xlu0 %1001
        %v1003 = vsel %vm572, %v979, 0.0
        %1004 = vadd.xlane.f32.xlu0 %v1003
        %v1005 = vpop.xlane.xlu0 %1004
        %v1006 = vsel %vm572, %v980, 0.0
        %1007 = vadd.xlane.f32.xlu0 %v1006
        %v1008 = vpop.xlane.xlu0 %1007
        %v1009 = vsel %vm572, %v981, 0.0
        %1010 = vadd.xlane.f32.xlu0 %v1009
        %v1011 = vpop.xlane.xlu0 %1010
        %v1012 = vsel %vm572, %v982, 0.0
        %1013 = vadd.xlane.f32.xlu0 %v1012
        %v1014 = vpop.xlane.xlu0 %1013
        %v1015 = vsel %vm572, %v983, 0.0
        %1016 = vadd.xlane.f32.xlu0 %v1015
        %v1017 = vpop.xlane.xlu0 %1016
        %v1018 = vsel %vm572, %v984, 0.0
        %1019 = vadd.xlane.f32.xlu0 %v1018
        %v1020 = vpop.xlane.xlu0 %1019
        %v1021 = vsel %vm572, %v985, 0.0
        %1022 = vadd.xlane.f32.xlu0 %v1021
        %v1023 = vpop.xlane.xlu0 %1022
        %v1024 = vsel %vm572, %v986, 0.0
        %1025 = vadd.xlane.f32.xlu0 %v1024
        %v1026 = vpop.xlane.xlu0 %1025
        %v1027 = vsel %vm572, %v987, 0.0
        %1028 = vadd.xlane.f32.xlu0 %v1027
        %v1029 = vpop.xlane.xlu0 %1028
        %v1030 = vsel %vm572, %v988, 0.0
        %1031 = vadd.xlane.f32.xlu0 %v1030
        %v1032 = vpop.xlane.xlu0 %1031
        %v1033 = vsel %vm572, %v989, 0.0
        %1034 = vadd.xlane.f32.xlu0 %v1033
        %v1035 = vpop.xlane.xlu0 %1034
        %v1036 = vsel %vm572, %v990, 0.0
        %1037 = vadd.xlane.f32.xlu0 %v1036
        %v1038 = vpop.xlane.xlu0 %1037
        %v1039 = vsub.f32 %v830, %v993
        %v1040 = vsub.f32 %v831, %v996
        %v1041 = vsub.f32 %v832, %v999
        %v1042 = vsub.f32 %v833, %v1002
        %v1043 = vsub.f32 %v834, %v1005
        %v1044 = vsub.f32 %v835, %v1008
        %v1045 = vsub.f32 %v836, %v1011
        %v1046 = vsub.f32 %v837, %v1014
        %v1047 = vsub.f32 %v838, %v1017
        %v1048 = vsub.f32 %v839, %v1020
        %v1049 = vsub.f32 %v840, %v1023
        %v1050 = vsub.f32 %v841, %v1026
        %v1051 = vsub.f32 %v842, %v1029
        %v1052 = vsub.f32 %v843, %v1032
        %v1053 = vsub.f32 %v844, %v1035
        %v1054 = vsub.f32 %v845, %v1038
        %vm1055 = vcmask 7168
        %1056 = vst.msk [vmem:[%s244] sm:$0xff] %vm1055, %v1039
        %1057 = vst.msk [vmem:[%s244 + $0x8] sm:$0xff] %vm1055, %v1040
        %1058 = vst.msk [vmem:[%s244 + $0x10] sm:$0xff] %vm1055, %v1041
        %1059 = vst.msk [vmem:[%s244 + $0x18] sm:$0xff] %vm1055, %v1042
        %1060 = vst.msk [vmem:[%s244 + $0x20] sm:$0xff] %vm1055, %v1043
        %1061 = vst.msk [vmem:[%s244 + $0x28] sm:$0xff] %vm1055, %v1044
        %1062 = vst.msk [vmem:[%s244 + $0x30] sm:$0xff] %vm1055, %v1045
        %1063 = vst.msk [vmem:[%s244 + $0x38] sm:$0xff] %vm1055, %v1046
        %1064 = vst.msk [vmem:[%s244 + $0x40] sm:$0xff] %vm1055, %v1047
        %1065 = vst.msk [vmem:[%s244 + $0x48] sm:$0xff] %vm1055, %v1048
        %1066 = vst.msk [vmem:[%s244 + $0x50] sm:$0xff] %vm1055, %v1049
        %1067 = vst.msk [vmem:[%s244 + $0x58] sm:$0xff] %vm1055, %v1050
        %1068 = vst.msk [vmem:[%s244 + $0x60] sm:$0xff] %vm1055, %v1051
        %1069 = vst.msk [vmem:[%s244 + $0x68] sm:$0xff] %vm1055, %v1052
        %1070 = vst.msk [vmem:[%s244 + $0x70] sm:$0xff] %vm1055, %v1053
        %1071 = vst.msk [vmem:[%s244 + $0x78] sm:$0xff] %vm1055, %v1054
        %s1072 = sand.u32 %s122, 1
        %s1073 = scalar_lea.sflag [#allocation3], %s1072
        %s1074 = sand.u32 %s122, 1
        %s1075 = smul.addr %s1074, 128
        %s1076 = scalar_lea.vmem [#allocation2], %s1075
        %s1077 = smul.u32 16, %s20
        %p1078 = scmp.lt.s32.totalorder %s1077, 31
        %s1079 = scalar_select %p1078, %s1077, 31
        %s1080 = smul.addr %s1079, 8
        %s1081 = scalar_lea.vmem %s5, %s1080
        // Predicated region
        $region37: #{tpu_custom_call.1} parent=35 // pred_check
          %p1082 = pneg %p132
        $region38: #{tpu_custom_call.1} parent=35 // pred_check_branch
          %1084 = sbr.rel (%p1082) target = $region40
        $region39: #{tpu_custom_call.1} parent=35 // pred_region
          %s1085 = smul.u32 16, %s20
          %1087 = vsyncadd %s1073, 0
          %s1088 = smul.addr %s1085, 8
          %s1089 = scalar_lea.hbm %s4, %s1088
          %s1090 = sshll.u32 %s1076, 4
          %s1091 = int_to_ptr.vmem [resolvable:$true] %s1090
          %s1092 = sshll.u32 %s1089, 4
          %s1093 = int_to_ptr.hbm [resolvable:$true] %s1092
          %1098 = dma.vmem_to_hbm [thread:$0]  %s1091, 2048, %s1093, %s1073, 128, 128, 8
        $region40: #{tpu_custom_call.1} parent=35 // pred_fallthru
          _
        // Predicated region
        $region41: #{tpu_custom_call.1} parent=35 // pred_check
          %p1099 = pneg %p158
        $region42: #{tpu_custom_call.1} parent=35 // pred_check_branch
          %1101 = sbr.rel (%p1099) target = $region44
        $region43: #{tpu_custom_call.1} parent=35 // pred_region
          %s1102 = smul.u32 16, %s20
        $region44: #{tpu_custom_call.1} parent=35 // pred_fallthru
          _
      $region36: #{tpu_custom_call.1} parent=5 // pred_fallthru
        _
      %p1103 = scmp.le.s32.totalorder 2, %s15
      // Predicated region
      $region45: #{tpu_custom_call.1} parent=5 // pred_check
        %p1104 = pneg %p1103
      $region46: #{tpu_custom_call.1} parent=5 // pred_check_branch
        %1106 = sbr.rel (%p1104) target = $region48
      $region47: #{tpu_custom_call.1} parent=5 // pred_region
        %s1107 = ssub.s32 %s15, 2
        // Predicated region
        $region49: #{tpu_custom_call.1} parent=47 // pred_check
          %p1108 = pneg %p138
        $region50: #{tpu_custom_call.1} parent=47 // pred_check_branch
          %1110 = sbr.rel (%p1108) target = $region52
        $region51: #{tpu_custom_call.1} parent=47 // pred_region
          %s1111 = sand.u32 %s123, 1
          %s1112 = scalar_lea.sflag [#allocation3], %s1111
          %s1113 = sand.u32 %s123, 1
          %s1114 = smul.addr %s1113, 128
          %s1115 = scalar_lea.vmem [#allocation2], %s1114
          %1117 = dma.done %s1112, 2048
        $region52: #{tpu_custom_call.1} parent=47 // pred_fallthru
          _
        // Predicated region
        $region53: #{tpu_custom_call.1} parent=47 // pred_check
          %p1118 = pneg %p164
        $region54: #{tpu_custom_call.1} parent=47 // pred_check_branch
          %1120 = sbr.rel (%p1118) target = $region56
        $region55: #{tpu_custom_call.1} parent=47 // pred_region
          %s1121 = smul.u32 16, %s21
          %p1122 = scmp.lt.s32.totalorder %s1121, 31
          %s1123 = scalar_select %p1122, %s1121, 31
          %s1124 = smul.addr %s1123, 8
          %s1125 = scalar_lea.vmem %s5, %s1124
        $region56: #{tpu_custom_call.1} parent=47 // pred_fallthru
          _
      $region48: #{tpu_custom_call.1} parent=5 // pred_fallthru
        _
    $region6: #{tpu_custom_call.1} parent=1 // loop_footer
      %s19 = sadd.s32 1, %s15
    $region7: #{tpu_custom_call.1} parent=1 // loop_footer_branch
      %14 = sbr.rel target = $region3
    $region8: #{tpu_custom_call.1} parent=1 // loop_exit
      _
    %1126 = vsyncpa [#allocation3], 1
    %s1127 = scalar_lea.sflag [#allocation3], 1
    %1128 = vsyncpa %s1127, 1

</llo_original>
